<compile_context>
chip_gen: v7x
topology: tpu7x:2x2x1
jax: 0.10.0
libtpu: 0.0.40
codegen_flags: <defaults>
</compile_context>

<pallas_src>
import jax
import jax.numpy as jnp
import numpy as np
from jax.experimental import pallas as pl
from jax.experimental.pallas import tpu as pltpu


def _copy_kernel(x_ref, o_ref):
    # Identity copy of the current (tr, lanes) tile; the reshape itself is
    # metadata and already applied in the wrapper.
    o_ref[...] = x_ref[...]


def _choose_slab(total_elems, itemsize):
    """Pick a lane-dense 2D slab (rows, lanes) and a row-tile size tr."""
    lanes = None
    for cand in (2048, 1024, 512, 256, 128):
        if total_elems % cand == 0:
            lanes = cand
            break
    if lanes is None:
        # Cannot form a 128-multiple lane dim; fall back to a single
        # full-extent block (block dims == array dims is always legal).
        # TODO(synk): very large non-128-divisible totals would need padding.
        return 1, total_elems, 1
    rows = total_elems // lanes
    # ~2 MiB per tile buffer: safe under every generation's scoped-VMEM
    # default once the pipeliner double-buffers input and output.
    target_rows = max(8, (2 * 1024 * 1024) // (lanes * itemsize))
    if rows <= target_rows:
        return rows, lanes, rows            # single full-extent block
    tr = None
    for cand in range(target_rows - (target_rows % 8), 7, -8):
        if rows % cand == 0:                # prefer tiles that divide evenly
            tr = cand
            break
    if tr is None:
        tr = 8                              # cdiv grid handles the ragged tail
    return rows, lanes, tr


def reshape_pallas(x, target_shape):
    """Equivalent of Reshape(shape).forward(x): returns (B, s0, s1)."""
    b = x.shape[0]
    s0, s1 = target_shape
    total = b * s0 * s1
    assert int(np.prod(x.shape)) == total, "element count mismatch"

    # Metadata-only reshape — this already implements torch.reshape semantics.
    out_meta = jnp.reshape(x, (b, s0, s1))

    # Materializing copy done as a lane-dense streaming copy over a flat slab.
    rows, lanes, tr = _choose_slab(total, jnp.dtype(x.dtype).itemsize)
    x2d = jnp.reshape(out_meta, (rows, lanes))
    grid = (pl.cdiv(rows, tr),)

    out2d = pl.pallas_call(
        _copy_kernel,
        out_shape=jax.ShapeDtypeStruct((rows, lanes), x.dtype),
        grid_spec=pl.GridSpec(
            grid=grid,
            in_specs=[pl.BlockSpec((tr, lanes), lambda i: (i, 0))],
            out_specs=pl.BlockSpec((tr, lanes), lambda i: (i, 0)),
        ),
        compiler_params=pltpu.CompilerParams(
            dimension_semantics=("parallel",),
        ),
    )(x2d)

    return jnp.reshape(out2d, (b, s0, s1))


if __name__ == "__main__":
    # Module config: Reshape(shape=(8, 128)); input (B=2, C=4, H=16, W=16)
    # has 4*16*16 = 1024 = 8*128 elements per batch item.
    target_shape = (8, 128)
    key = jax.random.PRNGKey(0)
    x = jax.random.normal(key, (2, 4, 16, 16), dtype=jnp.float32)

    y = reshape_pallas(x, target_shape)
    y = jax.block_until_ready(y)

    # Reference: plain row-major reshape (same semantics as torch.reshape).
    y_ref = np.asarray(x).reshape(2, *target_shape)
    np.testing.assert_array_equal(np.asarray(y), y_ref)
    assert y.shape == (2, 8, 128)
    assert y.dtype == x.dtype

    print("KERNEL_OK")
</pallas_src>

<mosaic_0001>
module attributes {stable_mosaic.version = 11 : i64} {
  func.func @_copy_kernel(%arg0: i32, %arg1: memref<1x2048xf32, #tpu.memory_space<vmem>>, %arg2: memref<1x2048xf32, #tpu.memory_space<vmem>>) attributes {dimension_semantics = [#tpu.dimension_semantics<parallel>], iteration_bounds = array<i64: 1>, scalar_prefetch = 0 : i64, scratch_operands = 0 : i64, tpu.core_type = #tpu.core_type<tc>, window_params = [{transform_indices = @transform_0, window_bounds = array<i64: 1, 2048>}, {transform_indices = @transform_1, window_bounds = array<i64: 1, 2048>}]} {
    %c0 = arith.constant 0 : index
    %c0_0 = arith.constant 0 : index
    %0 = vector.load %arg1[%c0, %c0_0] : memref<1x2048xf32, #tpu.memory_space<vmem>>, vector<1x2048xf32>
    %c0_1 = arith.constant 0 : index
    %c0_2 = arith.constant 0 : index
    %1 = vector.load %arg2[%c0_1, %c0_2] : memref<1x2048xf32, #tpu.memory_space<vmem>>, vector<1x2048xf32>
    tpu.vector_store %arg2[%c0_1, %c0_2], %0 {strides = array<i32>} : memref<1x2048xf32, #tpu.memory_space<vmem>>, vector<1x2048xf32>,
    return
  }
  func.func @transform_0(%arg0: i32) -> (i32, i32) {
    %c0_i32 = arith.constant 0 : i32
    %c0_i32_0 = arith.constant 0 : i32
    return %arg0, %c0_i32 : i32, i32
  }
  func.func @transform_1(%arg0: i32) -> (i32, i32) {
    %c0_i32 = arith.constant 0 : i32
    %c0_i32_0 = arith.constant 0 : i32
    return %arg0, %c0_i32 : i32, i32
  }
}

</mosaic_0001>

<llo_original>
// kernel: tpu_custom_call.1
$region0: #{tpu_custom_call.1}
  #allocation0 [shape = 'u32[]', space=smem, size = 0x4, offset = 0x4, fixed_abs, tag = 'smem constant byte address 0x4 - core index']
  #allocation1 [shape = 'u32[144,128]{1,0:T(1,128)}', space=vmem, size = 0x12000, scoped, tag = 'internal scratch']
  %s0 = inlined_call_operand.hbm [shape: f32[1,2048], index: 0, kind: input, shape index: {}]
  %s1 = inlined_call_operand.hbm [shape: f32[1,2048], index: 1, kind: output, shape index: {}]
  %s2 = sld [smem:[#allocation0]]
  $region18: #{tpu_custom_call.1} parent=0
    _
  %s4 = ssub.s32 1, %s2
  %s5 = scalar_select 0, %s4, %s2
  $region1: #{tpu_custom_call.1} parent=0
    #allocation2 [shape = 'u8[8192]{0}', space=vmem, size = 0x2000, scoped, tag = 'input window, operand 0, single buffered']
    #allocation3 [shape = 's32[1]{0}', space=sflag, size = 0x4, scoped, tag = 'scoped memory for tpu_custom_call.1']
    #allocation4 [shape = 's32[1]{0}', space=sflag, size = 0x4, scoped, tag = 'scoped memory for tpu_custom_call.1']
    #allocation5 [shape = 'u8[8192]{0}', space=vmem, size = 0x2000, scoped, tag = 'output window, operand 0, single buffered']
    %6 = vsyncpa [#allocation3], 0
    %7 = vsyncpa [#allocation4], 0
    // Predicated region
    $region2: #{tpu_custom_call.1} parent=1 // pred_check
      _
    $region3: #{tpu_custom_call.1} parent=1 // pred_check_branch
      %9 = sbr.rel (0) target = $region5
    $region4: #{tpu_custom_call.1} parent=1 // pred_region
      %s11 = ssub.s32 256, 256
      %12 = vsyncadd [#allocation3], %s11
      %s14 = sshll.u32 [#allocation2], 4
      %s15 = int_to_ptr.vmem [resolvable:$true] %s14
      %17 = dma.hbm_to_vmem [thread:$0]  %s0, 256, %s15, [#allocation3]
    $region5: #{tpu_custom_call.1} parent=1 // pred_fallthru
      _
    // Predicated region
    $region6: #{tpu_custom_call.1} parent=1 // pred_check
      _
    $region7: #{tpu_custom_call.1} parent=1 // pred_check_branch
      %19 = sbr.rel (0) target = $region9
    $region8: #{tpu_custom_call.1} parent=1 // pred_region
      %20 = dma.done [#allocation3], 256
    $region9: #{tpu_custom_call.1} parent=1 // pred_fallthru
      _
    %v21 = vld [vmem:[#allocation2] sm:$0xff]
    %v22 = vld [vmem:[#allocation2 + $0x8] sm:$0xff]
    %23 = vst [vmem:[#allocation5] sm:$0xff] %v21
    %24 = vst [vmem:[#allocation5 + $0x8] sm:$0xff] %v22
    // Predicated region
    $region10: #{tpu_custom_call.1} parent=1 // pred_check
      _
    $region11: #{tpu_custom_call.1} parent=1 // pred_check_branch
      %26 = sbr.rel (0) target = $region13
    $region12: #{tpu_custom_call.1} parent=1 // pred_region
      %s28 = ssub.s32 256, 256
      %29 = vsyncadd [#allocation4], %s28
      %s31 = sshll.u32 [#allocation5], 4
      %s32 = int_to_ptr.vmem [resolvable:$true] %s31
      %34 = dma.vmem_to_hbm [thread:$0]  %s32, 256, %s1, [#allocation4]
    $region13: #{tpu_custom_call.1} parent=1 // pred_fallthru
      _
    // Predicated region
    $region14: #{tpu_custom_call.1} parent=1 // pred_check
      _
    $region15: #{tpu_custom_call.1} parent=1 // pred_check_branch
      %36 = sbr.rel (0) target = $region17
    $region16: #{tpu_custom_call.1} parent=1 // pred_region
      %37 = dma.done [#allocation4], 256
    $region17: #{tpu_custom_call.1} parent=1 // pred_fallthru
      _
    %38 = vsyncpa [#allocation3], 1
    %39 = vsyncpa [#allocation4], 1

</llo_original>
